<compile_context>
chip_gen: v5e
topology: v5e:2x2
jax: 0.10.0
libtpu: 0.0.40
codegen_flags: <defaults>
</compile_context>

<pallas_src>
import functools
import numpy as np

import jax
import jax.numpy as jnp
from jax.experimental import pallas as pl
from jax.experimental.pallas import tpu as pltpu

# ---------------- synthetic cfg (cfg.MODEL.DPP.*) ----------------
NUM_CLASSES = 20
NUM_PROPOSALS = 16
FOCAL_ALPHA = 0.25          # cfg.MODEL.DPP.ALPHA
FOCAL_GAMMA = 2.0           # cfg.MODEL.DPP.GAMMA
PRUNE_STAGE = [1]
PRUNE_LOWERBOUND = 4
PRUNE_MULTIPLIER = 2
PRUNE_LOWERBOUND_ST = 6
PRUNE_MULTIPLIER_ST = 3
PRUNE_INTERIOU_ALPHA = 2.0
USE_FOCAL = True
LOSSES = ("labels", "boxes")

_EPS = 1e-7
_NEG_LOGIT_PAD = -1e4       # padded class lanes contribute exactly 0 focal loss


def _round_up(x, m):
    return ((x + m - 1) // m) * m


# ======================= Pallas kernels =======================

def _pairwise_iou_kernel(b1_ref, b2t_ref, iou_ref):
    """IoU of pred boxes [S,B,P,4] vs GT boxes (coord-major) [B,4,T_pad].

    Single grid step: the (stage, batch) loop is statically unrolled so every
    slice is plain 2-D (P,*) / (*,T_pad) vreg math. Exact divide on purpose —
    this feeds the matcher's argmax (approx reciprocal could flip near-ties).
    """
    num_stages, batch, _, _ = b1_ref.shape
    boxes = b1_ref[...]                      # (S, B, P, 4)
    gts = b2t_ref[...]                       # (B, 4, T_pad)
    for s in range(num_stages):
        for b in range(batch):
            b1 = boxes[s, b]                 # (P, 4)
            b2t = gts[b]                     # (4, T_pad)
            x1a, y1a, x2a, y2a = b1[:, 0:1], b1[:, 1:2], b1[:, 2:3], b1[:, 3:4]
            x1b, y1b, x2b, y2b = b2t[0:1, :], b2t[1:2, :], b2t[2:3, :], b2t[3:4, :]
            area1 = (x2a - x1a) * (y2a - y1a)                  # (P, 1)
            area2 = (x2b - x1b) * (y2b - y1b)                  # (1, T_pad)
            iw = jnp.maximum(jnp.minimum(x2a, x2b) - jnp.maximum(x1a, x1b), 0.0)
            ih = jnp.maximum(jnp.minimum(y2a, y2b) - jnp.maximum(y1a, y1b), 0.0)
            inter = iw * ih
            union = area1 + area2 - inter
            iou = inter / jnp.maximum(union, _EPS)             # exact divide
            iou_ref[s, b] = iou                                # (P, T_pad) store


def _fused_loss_kernel(logits_ref, labels_ref, mask_ref,
                       src_ref, tgt_ref, img_ref, valid_ref,
                       out_ref, *, alpha, gamma):
    """All stages in one step: focal-cls sum, sum(1-GIoU), normalized-L1 sum.

    Output: (S, 1, 128) lane-dense rows, lanes 0..2 = focal / giou / l1 sums.
    """
    num_stages = logits_ref.shape[0]
    X = logits_ref[...]               # (S, M, Cp)  lane-dense class axis
    Z = labels_ref[...]               # (S, M, Cp)  one-hot targets
    m = mask_ref[...]                 # (M, 1)      policy row mask (shared)
    Sb = src_ref[...]                 # (S, 4, Kp)  matched pred boxes, coord-major
    t_ = tgt_ref[...]                 # (4, Kp)     matched GT boxes (shared)
    img = img_ref[...]                # (4, Kp)     image sizes (shared)
    v = valid_ref[...]                # (1, Kp)     valid-pair mask (shared)

    inv_img = pl.reciprocal(img, approx=True)
    tx1, ty1, tx2, ty2 = t_[0:1, :], t_[1:2, :], t_[2:3, :], t_[3:4, :]
    area_t = (tx2 - tx1) * (ty2 - ty1)
    lane = jax.lax.broadcasted_iota(jnp.int32, (1, 128), 1)

    for s in range(num_stages):
        # ----- masked sigmoid focal classification loss -----
        x = X[s]                      # (M, Cp)
        z = Z[s]
        p = jax.nn.sigmoid(x)
        ce = jnp.maximum(x, 0.0) - x * z + jnp.log(1.0 + jnp.exp(-jnp.abs(x)))
        p_t = p * z + (1.0 - p) * (1.0 - z)
        base = 1.0 - p_t
        mod = base * base if float(gamma) == 2.0 else base ** gamma
        loss = mod * (ce * m)         # fold the row mask in once, on ce
        if alpha >= 0:
            loss = (alpha * z + (1.0 - alpha) * (1.0 - z)) * loss
        focal_sum = jnp.sum(loss)

        # ----- matched-pair GIoU + normalized L1 (coord-major: (4, Kp)) -----
        s_ = Sb[s]                    # (4, Kp)
        sx1, sy1, sx2, sy2 = s_[0:1, :], s_[1:2, :], s_[2:3, :], s_[3:4, :]
        area_s = (sx2 - sx1) * (sy2 - sy1)
        iw = jnp.maximum(jnp.minimum(sx2, tx2) - jnp.maximum(sx1, tx1), 0.0)
        ih = jnp.maximum(jnp.minimum(sy2, ty2) - jnp.maximum(sy1, ty1), 0.0)
        inter = iw * ih
        union = area_s + area_t - inter
        iou = inter * pl.reciprocal(jnp.maximum(union, _EPS), approx=True)
        cw = jnp.maximum(jnp.maximum(sx2, tx2) - jnp.minimum(sx1, tx1), 0.0)
        ch = jnp.maximum(jnp.maximum(sy2, ty2) - jnp.minimum(sy1, ty1), 0.0)
        area_c = cw * ch
        giou = iou - (area_c - union) * pl.reciprocal(jnp.maximum(area_c, _EPS),
                                                      approx=True)
        giou_sum = jnp.sum((1.0 - giou) * v)
        # |s/img - t/img| == |s - t| * (1/img) for img > 0 -> one reciprocal
        l1 = jnp.abs((s_ - t_) * inv_img)
        l1_sum = jnp.sum(l1 * v)

        # ----- lane-dense scalar row: [focal, giou, l1, 0, ...] -----
        row = (jnp.where(lane == 0, focal_sum, 0.0)
               + jnp.where(lane == 1, giou_sum, 0.0)
               + jnp.where(lane == 2, l1_sum, 0.0))
        out_ref[s] = row              # (1, 128)


# ======================= kernel wrappers =======================

def batched_pairwise_iou(boxes_all, gt_t):
    """boxes_all: [S,B,P,4] f32; gt_t: [B,4,T_pad] -> IoU [S,B,P,T_pad]; one step."""
    S, B, P, _ = boxes_all.shape
    T_pad = gt_t.shape[-1]
    return pl.pallas_call(
        _pairwise_iou_kernel,
        out_shape=jax.ShapeDtypeStruct((S, B, P, T_pad), jnp.float32),
        grid=(1,),
        in_specs=[pl.BlockSpec((S, B, P, 4), lambda i: (0, 0, 0, 0)),
                  pl.BlockSpec((B, 4, T_pad), lambda i: (0, 0, 0))],
        out_specs=pl.BlockSpec((S, B, P, T_pad), lambda i: (0, 0, 0, 0)),
        compiler_params=pltpu.CompilerParams(dimension_semantics=("arbitrary",)),
    )(boxes_all, gt_t)


def fused_stage_losses(logits, labels, row_mask, src_t, tgt_t, img_t, valid):
    """Single-step call over all stages; returns [S,1,128] (lanes 0..2 = sums)."""
    S, M, Cp = logits.shape
    Kp = src_t.shape[-1]
    kern = functools.partial(_fused_loss_kernel,
                             alpha=float(FOCAL_ALPHA), gamma=float(FOCAL_GAMMA))
    return pl.pallas_call(
        kern,
        out_shape=jax.ShapeDtypeStruct((S, 1, 128), jnp.float32),
        grid=(1,),
        in_specs=[
            pl.BlockSpec((S, M, Cp), lambda i: (0, 0, 0)),   # logits (all stages)
            pl.BlockSpec((S, M, Cp), lambda i: (0, 0, 0)),   # one-hot labels
            pl.BlockSpec((M, 1), lambda i: (0, 0)),          # policy row mask
            pl.BlockSpec((S, 4, Kp), lambda i: (0, 0, 0)),   # matched src boxes
            pl.BlockSpec((4, Kp), lambda i: (0, 0)),         # matched tgt boxes
            pl.BlockSpec((4, Kp), lambda i: (0, 0)),         # image sizes
            pl.BlockSpec((1, Kp), lambda i: (0, 0)),         # valid-pair mask
        ],
        out_specs=pl.BlockSpec((S, 1, 128), lambda i: (0, 0, 0)),
        compiler_params=pltpu.CompilerParams(dimension_semantics=("arbitrary",)),
    )(logits, labels, row_mask, src_t, tgt_t, img_t, valid)


# ======================= device-side greedy matcher =======================

def _greedy_match_device(iou_all, valid_bt, t_max):
    """Greedy max-IoU assignment per (stage, batch), entirely on device.

    iou_all:  [S, B, P, T_pad] matcher IoU.
    valid_bt: [B, T_max] 1.0 for real targets.
    Returns src_idx [S, B, T_max] int32 (proposal matched to each target slot).
    """
    # TODO(synk): the real DPP matcher is a Hungarian assignment over a
    # class+box cost (and uses the policy); this greedy stand-in ignores both.
    S, B, P, _ = iou_all.shape
    used = jnp.zeros((S, B, P), jnp.bool_)
    arange_p = jnp.arange(P, dtype=jnp.int32)
    cols = []
    for j in range(t_max):
        col = jnp.where(used, -1.0, iou_all[:, :, :, j])        # [S, B, P]
        k = jnp.argmax(col, axis=-1).astype(jnp.int32)          # [S, B]
        vj = valid_bt[:, j] > 0.5                               # [B]
        hit = (arange_p[None, None, :] == k[:, :, None]) & vj[None, :, None]
        used = used | hit
        cols.append(k)
    return jnp.stack(cols, axis=-1)                             # [S, B, T_max]


# ======================= SetCriterion.forward =======================

def set_criterion_forward(outputs, targets, training=True):
    policy = outputs["policy"]
    policy_st = outputs["policy_st"]
    aux_list = outputs.get("aux_outputs", [])

    stage_logits = [outputs["pred_logits"]] + [a["pred_logits"] for a in aux_list]
    stage_boxes = [outputs["pred_boxes"]] + [a["pred_boxes"] for a in aux_list]
    S = len(stage_boxes)
    B, P, C = outputs["pred_logits"].shape
    M = B * P
    C_pad = max(128, _round_up(C, 128))            # lane-dense class axis

    # Target lengths / labels live on host already (list-of-dicts) -> static.
    T_list = [int(len(t["labels"])) for t in targets]
    T_max = max(T_list + [1])
    T_pad = max(128, _round_up(T_max, 128))        # lane-dense IoU output axis

    # -------- device prep (one shot) --------
    boxes_all = jnp.stack(stage_boxes, 0).astype(jnp.float32)        # [S, B, P, 4]
    dummy_box = jnp.asarray([0.0, 0.0, 1.0, 1.0], jnp.float32)
    gt_pad = []
    for t in targets:
        gt = jnp.asarray(t["boxes_xyxy"], jnp.float32).reshape(-1, 4)
        pad = T_pad - gt.shape[0]
        gt_pad.append(jnp.concatenate([gt, jnp.tile(dummy_box[None], (pad, 1))], 0))
    gt_pad = jnp.stack(gt_pad, 0)                                    # [B, T_pad, 4]
    gt_pad_t = jnp.transpose(gt_pad, (0, 2, 1))                      # [B, 4, T_pad]

    # -------- single-step batched IoU kernel (no host sync afterwards) --------
    iou_all = batched_pairwise_iou(boxes_all, gt_pad_t)              # [S, B, P, T_pad]

    # -------- host-static bookkeeping from target lengths/labels only --------
    valid_cols_np = np.zeros((B, T_pad), np.float32)
    labels_pad_np = np.zeros((B, T_max), np.int32)
    valid_bt_np = np.zeros((B, T_max), np.float32)
    for b, t in enumerate(targets):
        Tb = T_list[b]
        valid_cols_np[b, :Tb] = 1.0
        if Tb > 0:
            labels_pad_np[b, :Tb] = np.asarray(t["labels"], np.int64)
            valid_bt_np[b, :Tb] = 1.0
    valid_bt = jnp.asarray(valid_bt_np)
    valid_cols = jnp.asarray(valid_cols_np)

    # -------- device greedy matcher + per-proposal max IoU --------
    src_idx = _greedy_match_device(iou_all, valid_bt, T_max)         # [S, B, T_max]
    iou_max = jnp.max(iou_all * valid_cols[None, :, None, :], axis=-1)  # [S, B, P]

    num_boxes = max(float(sum(T_list)), 1.0)                         # world_size == 1
    K = sum(T_list)
    K_pad = max(128, _round_up(max(K, 1), 128))                      # lane-dense pair axis
    denom_box = float(max(K, 1))

    # matched-pair layout (batch-major target order), static from T_list
    pair_b_np = np.zeros((K_pad,), np.int32)
    pair_j_np = np.zeros((K_pad,), np.int32)
    col = 0
    for b, Tb in enumerate(T_list):
        pair_b_np[col:col + Tb] = b
        pair_j_np[col:col + Tb] = np.arange(Tb, dtype=np.int32)
        col += Tb

    # -------- one-hot labels per stage (device scatter via tiny einsum) --------
    flat_row = jnp.arange(B, dtype=jnp.int32)[None, :, None] * P + src_idx   # [S,B,Tm]
    row_onehot = (flat_row[..., None] ==
                  jnp.arange(M, dtype=jnp.int32)).astype(jnp.float32)        # [S,B,Tm,M]
    cls_onehot = ((jnp.asarray(labels_pad_np)[..., None] ==
                   jnp.arange(C_pad, dtype=jnp.int32)).astype(jnp.float32)
                  * valid_bt[..., None])                                     # [B,Tm,Cp]
    labels_all = jnp.einsum("sbtm,btc->smc", row_onehot, cls_onehot)         # [S,M,Cp]

    # -------- lane-dense logits (pad classes with a large negative constant) --------
    logits_all = jnp.stack([l.reshape(M, C) for l in stage_logits], 0).astype(jnp.float32)
    if C_pad > C:
        logits_all = jnp.pad(logits_all, ((0, 0), (0, 0), (0, C_pad - C)),
                             constant_values=_NEG_LOGIT_PAD)

    # policy[0] row mask (same for main + aux), kept on device
    row_mask = (policy[0].reshape(M, -1)[:, 0].astype(jnp.int32) != 0) \
        .astype(jnp.float32).reshape(M, 1)

    # -------- coord-major gathers of matched boxes (no post-gather transpose) --------
    src_sel = src_idx[:, pair_b_np, pair_j_np]                        # [S, K_pad]
    src_gather = jnp.asarray(pair_b_np)[None, :] * P + src_sel        # flat into B*P
    pred_cm = jnp.transpose(boxes_all.reshape(S, B * P, 4), (0, 2, 1))  # [S,4,B*P]
    idx3 = jnp.broadcast_to(src_gather[:, None, :], (S, 4, K_pad)).astype(jnp.int32)
    src_t = jnp.take_along_axis(pred_cm, idx3, axis=2)                # [S, 4, K_pad]

    tgt_flat_np = pair_b_np * T_pad + pair_j_np                       # static indices
    gt_cm = jnp.transpose(gt_pad.reshape(B * T_pad, 4), (1, 0))       # [4, B*T_pad]
    tgt_t = gt_cm[:, tgt_flat_np]                                     # [4, K_pad] shared

    # image sizes + valid-pair mask (identical across stages -> shared blocks)
    if K > 0:
        img_rows = [jnp.asarray(t["image_size_xyxy_tgt_match"], jnp.float32)[:T_list[b]]
                    for b, t in enumerate(targets)]
        img_cat = jnp.concatenate(img_rows, 0)
    else:
        img_cat = jnp.zeros((0, 4), jnp.float32)
    img_pad = jnp.concatenate([img_cat, jnp.ones((K_pad - K, 4), jnp.float32)], 0)
    img_t = img_pad.T                                                 # [4, K_pad]
    valid = jnp.asarray(
        np.concatenate([np.ones((K,), np.float32),
                        np.zeros((K_pad - K,), np.float32)])).reshape(1, K_pad)

    # -------- single-step fused loss kernel over all stages --------
    sums = fused_stage_losses(logits_all, labels_all, row_mask,
                              src_t, tgt_t, img_t, valid)             # [S, 1, 128]

    losses = {}
    for s in range(S):
        suffix = "" if s == 0 else f"_{s - 1}"
        losses["loss_ce" + suffix] = sums[s, 0, 0] / num_boxes
        losses["loss_giou" + suffix] = sums[s, 0, 1] / denom_box
        losses["loss_bbox" + suffix] = sums[s, 0, 2] / denom_box

    # -------- prune / inter-IoU losses (all device-side, no host syncs) --------
    pred_interIOU_loss = 0.0
    pred_interIOU_loss_st = 0.0
    if len(aux_list) > 0:
        # union over aux stages of matched src proposals, per batch element
        arange_p = jnp.arange(P, dtype=jnp.int32)
        hit_all = (src_idx[1:, :, :, None] == arange_p) & (valid_bt[None, :, :, None] > 0.5)
        spec_mask = jnp.any(hit_all, axis=(0, 2))                     # [B, P] bool

        for i in range(len(aux_list)):
            if (i + 1) not in PRUNE_STAGE or (i + 1) >= len(policy):
                continue
            mask = jax.lax.stop_gradient(policy[i + 1][:, :, 0])      # [B, P]
            # NOTE: the reference also builds a pairwise pred-box IoU matrix here
            # (pred_ious) that is never read afterwards; that dead compute is dropped.
            iou_i = iou_max[i + 1]                                    # aux-stage matcher IoU
            coeff1 = (1.0 - iou_i) ** PRUNE_INTERIOU_ALPHA
            coeff2 = 1.0 - coeff1
            coeff1 = jnp.where(spec_mask, 0.0, coeff1)
            coeff2 = jnp.where(spec_mask, 5.0, coeff2)
            pol = policy[i + 1][:, :, 0]
            pol_st = policy_st[i + 1][:, :, 0]
            msum = jnp.sum(mask)
            denom_m = jnp.where(msum > 0, msum, 1.0)
            pred_l = (coeff1 * pol + coeff2 * (1.0 - pol)) * mask / denom_m
            inv_sum = jnp.sum(1.0 - mask)
            denom_i = jnp.where(inv_sum > 0, inv_sum, 1.0)
            pred_l_st = (coeff1 * pol_st + coeff2 * (1.0 - pol_st)) * (1.0 - mask) / denom_i
            pred_interIOU_loss = pred_interIOU_loss + jnp.sum(pred_l)
            pred_interIOU_loss_st = pred_interIOU_loss_st + jnp.sum(pred_l_st)

    pred_loss = 0.0
    pred_loss_st = 0.0
    N = len(targets)
    if len(PRUNE_STAGE) > 0:
        for i in range(N):
            num_pro_prune = min(max(PRUNE_MULTIPLIER * T_list[i], PRUNE_LOWERBOUND),
                                NUM_PROPOSALS)
            rho = (num_pro_prune / NUM_PROPOSALS) ** (1.0 / len(PRUNE_STAGE))
            num_pro_prune_st = min(max(PRUNE_MULTIPLIER_ST * T_list[i], PRUNE_LOWERBOUND_ST),
                                   NUM_PROPOSALS)
            rho_st = (num_pro_prune_st / NUM_PROPOSALS) ** (1.0 / len(PRUNE_STAGE))
            ratio = 1.0
            ratio_st = 1.0
            for j in range(len(PRUNE_STAGE)):
                if PRUNE_STAGE[j] >= len(policy):
                    continue
                ratio = ratio * rho
                ratio_st = ratio_st * rho_st
                pred_loss = pred_loss + (jnp.mean(policy[PRUNE_STAGE[j]][i]) - ratio) ** 2 / N
                pred_loss_st = pred_loss_st + (
                    jnp.mean(policy_st[PRUNE_STAGE[j]][i]) - min(ratio_st, 1.0 - ratio)) ** 2 / N
        losses["loss_prune"] = pred_loss
        losses["loss_prune_st"] = pred_loss_st
        losses["loss_prune_inter_iou"] = pred_interIOU_loss
        losses["loss_prune_inter_st_iou"] = pred_interIOU_loss_st
    return losses


# ======================= example inputs =======================

def _make_boxes(key, shape, img=64.0):
    k1, k2 = jax.random.split(key)
    xy = jax.random.uniform(k1, shape + (2,), minval=0.0, maxval=0.6 * img)
    wh = jax.random.uniform(k2, shape + (2,), minval=2.0, maxval=0.35 * img)
    return jnp.concatenate([xy, xy + wh], axis=-1).astype(jnp.float32)


if __name__ == "__main__":
    key = jax.random.PRNGKey(0)
    ks = jax.random.split(key, 12)
    B, P, C = 2, NUM_PROPOSALS, NUM_CLASSES
    img = 64.0

    pred_logits = jax.random.normal(ks[0], (B, P, C), jnp.float32)
    pred_boxes = _make_boxes(ks[1], (B, P), img)
    aux_logits = jax.random.normal(ks[2], (B, P, C), jnp.float32)
    aux_boxes = _make_boxes(ks[3], (B, P), img)

    policy0 = (jax.random.uniform(ks[4], (B, P, 1)) < 0.8).astype(jnp.float32)
    policy1 = (jax.random.uniform(ks[5], (B, P, 1)) < 0.5).astype(jnp.float32)
    policy_st0 = jax.random.uniform(ks[6], (B, P, 1), dtype=jnp.float32)
    policy_st1 = jax.random.uniform(ks[7], (B, P, 1), dtype=jnp.float32)

    outputs = {
        "pred_logits": pred_logits,
        "pred_boxes": pred_boxes,
        "aux_outputs": [{"pred_logits": aux_logits, "pred_boxes": aux_boxes}],
        "policy": [policy0, policy1],
        "policy_st": [policy_st0, policy_st1],
    }

    gt0 = _make_boxes(ks[8], (3,), img)
    gt1 = _make_boxes(ks[9], (2,), img)
    img_sz = jnp.full((P, 4), img, jnp.float32)
    targets = [
        {"labels": np.array([1, 5, 12], np.int64), "boxes_xyxy": gt0,
         "image_size_xyxy_tgt_match": img_sz},
        {"labels": np.array([0, 7], np.int64), "boxes_xyxy": gt1,
         "image_size_xyxy_tgt_match": img_sz},
    ]

    losses = set_criterion_forward(outputs, targets, training=True)
    for v in jax.tree_util.tree_leaves(losses):
        if isinstance(v, jax.Array):
            jax.block_until_ready(v)
    print("KERNEL_OK")
</pallas_src>

<mosaic_0001>
module attributes {stable_mosaic.version = 11 : i64} {
  func.func @_pairwise_iou_kernel(%arg0: i32, %arg1: memref<2x2x16x4xf32, #tpu.memory_space<vmem>>, %arg2: memref<2x4x128xf32, #tpu.memory_space<vmem>>, %arg3: memref<2x2x16x128xf32, #tpu.memory_space<vmem>>) attributes {dimension_semantics = [#tpu.dimension_semantics<arbitrary>], iteration_bounds = array<i64: 1>, scalar_prefetch = 0 : i64, scratch_operands = 0 : i64, tpu.core_type = #tpu.core_type<tc>, window_params = [{pipeline_mode = #tpu.pipeline_mode<synchronous>, transform_indices = @transform_0, window_bounds = array<i64: 2, 2, 16, 4>}, {pipeline_mode = #tpu.pipeline_mode<synchronous>, transform_indices = @transform_1, window_bounds = array<i64: 2, 4, 128>}, {pipeline_mode = #tpu.pipeline_mode<synchronous>, transform_indices = @transform_2, window_bounds = array<i64: 2, 2, 16, 128>}]} {
    %c0 = arith.constant 0 : index
    %c0_0 = arith.constant 0 : index
    %c0_1 = arith.constant 0 : index
    %c0_2 = arith.constant 0 : index
    %0 = vector.load %arg1[%c0, %c0_0, %c0_1, %c0_2] : memref<2x2x16x4xf32, #tpu.memory_space<vmem>>, vector<2x2x16x4xf32>
    %c0_3 = arith.constant 0 : index
    %c0_4 = arith.constant 0 : index
    %c0_5 = arith.constant 0 : index
    %1 = vector.load %arg2[%c0_3, %c0_4, %c0_5] : memref<2x4x128xf32, #tpu.memory_space<vmem>>, vector<2x4x128xf32>
    %2 = vector.extract_strided_slice %0 {offsets = [0, 0, 0, 0], sizes = [1, 1, 16, 4], strides = [1, 1, 1, 1]} : vector<2x2x16x4xf32> to vector<1x1x16x4xf32>
    %3 = vector.shape_cast %2 : vector<1x1x16x4xf32> to vector<16x4xf32>
    %4 = vector.extract_strided_slice %1 {offsets = [0, 0, 0], sizes = [1, 4, 128], strides = [1, 1, 1]} : vector<2x4x128xf32> to vector<1x4x128xf32>
    %5 = vector.shape_cast %4 : vector<1x4x128xf32> to vector<4x128xf32>
    %6 = vector.extract_strided_slice %3 {offsets = [0, 0], sizes = [16, 1], strides = [1, 1]} : vector<16x4xf32> to vector<16x1xf32>
    %7 = vector.extract_strided_slice %3 {offsets = [0, 1], sizes = [16, 1], strides = [1, 1]} : vector<16x4xf32> to vector<16x1xf32>
    %8 = vector.extract_strided_slice %3 {offsets = [0, 2], sizes = [16, 1], strides = [1, 1]} : vector<16x4xf32> to vector<16x1xf32>
    %9 = vector.extract_strided_slice %3 {offsets = [0, 3], sizes = [16, 1], strides = [1, 1]} : vector<16x4xf32> to vector<16x1xf32>
    %10 = vector.extract_strided_slice %5 {offsets = [0, 0], sizes = [1, 128], strides = [1, 1]} : vector<4x128xf32> to vector<1x128xf32>
    %11 = vector.extract_strided_slice %5 {offsets = [1, 0], sizes = [1, 128], strides = [1, 1]} : vector<4x128xf32> to vector<1x128xf32>
    %12 = vector.extract_strided_slice %5 {offsets = [2, 0], sizes = [1, 128], strides = [1, 1]} : vector<4x128xf32> to vector<1x128xf32>
    %13 = vector.extract_strided_slice %5 {offsets = [3, 0], sizes = [1, 128], strides = [1, 1]} : vector<4x128xf32> to vector<1x128xf32>
    %14 = arith.subf %8, %6 : vector<16x1xf32>
    %15 = arith.subf %9, %7 : vector<16x1xf32>
    %16 = arith.mulf %14, %15 : vector<16x1xf32>
    %17 = arith.subf %12, %10 : vector<1x128xf32>
    %18 = arith.subf %13, %11 : vector<1x128xf32>
    %19 = arith.mulf %17, %18 : vector<1x128xf32>
    %20 = vector.broadcast %8 : vector<16x1xf32> to vector<16x128xf32>
    %21 = vector.broadcast %12 : vector<1x128xf32> to vector<16x128xf32>
    %22 = arith.minimumf %20, %21 : vector<16x128xf32>
    %23 = vector.broadcast %6 : vector<16x1xf32> to vector<16x128xf32>
    %24 = vector.broadcast %10 : vector<1x128xf32> to vector<16x128xf32>
    %25 = arith.maximumf %23, %24 : vector<16x128xf32>
    %26 = arith.subf %22, %25 : vector<16x128xf32>
    %cst = arith.constant 0.000000e+00 : f32
    %27 = vector.broadcast %cst : f32 to vector<16x128xf32>
    %28 = arith.maximumf %26, %27 : vector<16x128xf32>
    %29 = vector.broadcast %9 : vector<16x1xf32> to vector<16x128xf32>
    %30 = vector.broadcast %13 : vector<1x128xf32> to vector<16x128xf32>
    %31 = arith.minimumf %29, %30 : vector<16x128xf32>
    %32 = vector.broadcast %7 : vector<16x1xf32> to vector<16x128xf32>
    %33 = vector.broadcast %11 : vector<1x128xf32> to vector<16x128xf32>
    %34 = arith.maximumf %32, %33 : vector<16x128xf32>
    %35 = arith.subf %31, %34 : vector<16x128xf32>
    %cst_6 = arith.constant 0.000000e+00 : f32
    %36 = vector.broadcast %cst_6 : f32 to vector<16x128xf32>
    %37 = arith.maximumf %35, %36 : vector<16x128xf32>
    %38 = arith.mulf %28, %37 : vector<16x128xf32>
    %39 = vector.broadcast %16 : vector<16x1xf32> to vector<16x128xf32>
    %40 = vector.broadcast %19 : vector<1x128xf32> to vector<16x128xf32>
    %41 = arith.addf %39, %40 : vector<16x128xf32>
    %42 = arith.subf %41, %38 : vector<16x128xf32>
    %cst_7 = arith.constant 1.000000e-07 : f32
    %43 = vector.broadcast %cst_7 : f32 to vector<16x128xf32>
    %44 = arith.maximumf %42, %43 : vector<16x128xf32>
    %45 = arith.divf %38, %44 : vector<16x128xf32>
    %c0_8 = arith.constant 0 : index
    %c0_9 = arith.constant 0 : index
    %c0_10 = arith.constant 0 : index
    %c0_11 = arith.constant 0 : index
    %46 = vector.load %arg3[%c0_8, %c0_9, %c0_10, %c0_11] : memref<2x2x16x128xf32, #tpu.memory_space<vmem>>, vector<1x1x16x128xf32>
    %47 = vector.shape_cast %46 : vector<1x1x16x128xf32> to vector<16x128xf32>
    %48 = vector.shape_cast %45 : vector<16x128xf32> to vector<1x1x16x128xf32>
    tpu.vector_store %arg3[%c0_8, %c0_9, %c0_10, %c0_11], %48 {strides = array<i32>} : memref<2x2x16x128xf32, #tpu.memory_space<vmem>>, vector<1x1x16x128xf32>,
    %49 = vector.extract_strided_slice %0 {offsets = [0, 1, 0, 0], sizes = [1, 1, 16, 4], strides = [1, 1, 1, 1]} : vector<2x2x16x4xf32> to vector<1x1x16x4xf32>
    %50 = vector.shape_cast %49 : vector<1x1x16x4xf32> to vector<16x4xf32>
    %51 = vector.extract_strided_slice %1 {offsets = [1, 0, 0], sizes = [1, 4, 128], strides = [1, 1, 1]} : vector<2x4x128xf32> to vector<1x4x128xf32>
    %52 = vector.shape_cast %51 : vector<1x4x128xf32> to vector<4x128xf32>
    %53 = vector.extract_strided_slice %50 {offsets = [0, 0], sizes = [16, 1], strides = [1, 1]} : vector<16x4xf32> to vector<16x1xf32>
    %54 = vector.extract_strided_slice %50 {offsets = [0, 1], sizes = [16, 1], strides = [1, 1]} : vector<16x4xf32> to vector<16x1xf32>
    %55 = vector.extract_strided_slice %50 {offsets = [0, 2], sizes = [16, 1], strides = [1, 1]} : vector<16x4xf32> to vector<16x1xf32>
    %56 = vector.extract_strided_slice %50 {offsets = [0, 3], sizes = [16, 1], strides = [1, 1]} : vector<16x4xf32> to vector<16x1xf32>
    %57 = vector.extract_strided_slice %52 {offsets = [0, 0], sizes = [1, 128], strides = [1, 1]} : vector<4x128xf32> to vector<1x128xf32>
    %58 = vector.extract_strided_slice %52 {offsets = [1, 0], sizes = [1, 128], strides = [1, 1]} : vector<4x128xf32> to vector<1x128xf32>
    %59 = vector.extract_strided_slice %52 {offsets = [2, 0], sizes = [1, 128], strides = [1, 1]} : vector<4x128xf32> to vector<1x128xf32>
    %60 = vector.extract_strided_slice %52 {offsets = [3, 0], sizes = [1, 128], strides = [1, 1]} : vector<4x128xf32> to vector<1x128xf32>
    %61 = arith.subf %55, %53 : vector<16x1xf32>
    %62 = arith.subf %56, %54 : vector<16x1xf32>
    %63 = arith.mulf %61, %62 : vector<16x1xf32>
    %64 = arith.subf %59, %57 : vector<1x128xf32>
    %65 = arith.subf %60, %58 : vector<1x128xf32>
    %66 = arith.mulf %64, %65 : vector<1x128xf32>
    %67 = vector.broadcast %55 : vector<16x1xf32> to vector<16x128xf32>
    %68 = vector.broadcast %59 : vector<1x128xf32> to vector<16x128xf32>
    %69 = arith.minimumf %67, %68 : vector<16x128xf32>
    %70 = vector.broadcast %53 : vector<16x1xf32> to vector<16x128xf32>
    %71 = vector.broadcast %57 : vector<1x128xf32> to vector<16x128xf32>
    %72 = arith.maximumf %70, %71 : vector<16x128xf32>
    %73 = arith.subf %69, %72 : vector<16x128xf32>
    %cst_12 = arith.constant 0.000000e+00 : f32
    %74 = vector.broadcast %cst_12 : f32 to vector<16x128xf32>
    %75 = arith.maximumf %73, %74 : vector<16x128xf32>
    %76 = vector.broadcast %56 : vector<16x1xf32> to vector<16x128xf32>
    %77 = vector.broadcast %60 : vector<1x128xf32> to vector<16x128xf32>
    %78 = arith.minimumf %76, %77 : vector<16x128xf32>
    %79 = vector.broadcast %54 : vector<16x1xf32> to vector<16x128xf32>
    %80 = vector.broadcast %58 : vector<1x128xf32> to vector<16x128xf32>
    %81 = arith.maximumf %79, %80 : vector<16x128xf32>
    %82 = arith.subf %78, %81 : vector<16x128xf32>
    %cst_13 = arith.constant 0.000000e+00 : f32
    %83 = vector.broadcast %cst_13 : f32 to vector<16x128xf32>
    %84 = arith.maximumf %82, %83 : vector<16x128xf32>
    %85 = arith.mulf %75, %84 : vector<16x128xf32>
    %86 = vector.broadcast %63 : vector<16x1xf32> to vector<16x128xf32>
    %87 = vector.broadcast %66 : vector<1x128xf32> to vector<16x128xf32>
    %88 = arith.addf %86, %87 : vector<16x128xf32>
    %89 = arith.subf %88, %85 : vector<16x128xf32>
    %cst_14 = arith.constant 1.000000e-07 : f32
    %90 = vector.broadcast %cst_14 : f32 to vector<16x128xf32>
    %91 = arith.maximumf %89, %90 : vector<16x128xf32>
    %92 = arith.divf %85, %91 : vector<16x128xf32>
    %c0_15 = arith.constant 0 : index
    %c1 = arith.constant 1 : index
    %c0_16 = arith.constant 0 : index
    %c0_17 = arith.constant 0 : index
    %93 = vector.load %arg3[%c0_15, %c1, %c0_16, %c0_17] : memref<2x2x16x128xf32, #tpu.memory_space<vmem>>, vector<1x1x16x128xf32>
    %94 = vector.shape_cast %93 : vector<1x1x16x128xf32> to vector<16x128xf32>
    %95 = vector.shape_cast %92 : vector<16x128xf32> to vector<1x1x16x128xf32>
    tpu.vector_store %arg3[%c0_15, %c1, %c0_16, %c0_17], %95 {strides = array<i32>} : memref<2x2x16x128xf32, #tpu.memory_space<vmem>>, vector<1x1x16x128xf32>,
    %96 = vector.extract_strided_slice %0 {offsets = [1, 0, 0, 0], sizes = [1, 1, 16, 4], strides = [1, 1, 1, 1]} : vector<2x2x16x4xf32> to vector<1x1x16x4xf32>
    %97 = vector.shape_cast %96 : vector<1x1x16x4xf32> to vector<16x4xf32>
    %98 = vector.extract_strided_slice %1 {offsets = [0, 0, 0], sizes = [1, 4, 128], strides = [1, 1, 1]} : vector<2x4x128xf32> to vector<1x4x128xf32>
    %99 = vector.shape_cast %98 : vector<1x4x128xf32> to vector<4x128xf32>
    %100 = vector.extract_strided_slice %97 {offsets = [0, 0], sizes = [16, 1], strides = [1, 1]} : vector<16x4xf32> to vector<16x1xf32>
    %101 = vector.extract_strided_slice %97 {offsets = [0, 1], sizes = [16, 1], strides = [1, 1]} : vector<16x4xf32> to vector<16x1xf32>
    %102 = vector.extract_strided_slice %97 {offsets = [0, 2], sizes = [16, 1], strides = [1, 1]} : vector<16x4xf32> to vector<16x1xf32>
    %103 = vector.extract_strided_slice %97 {offsets = [0, 3], sizes = [16, 1], strides = [1, 1]} : vector<16x4xf32> to vector<16x1xf32>
    %104 = vector.extract_strided_slice %99 {offsets = [0, 0], sizes = [1, 128], strides = [1, 1]} : vector<4x128xf32> to vector<1x128xf32>
    %105 = vector.extract_strided_slice %99 {offsets = [1, 0], sizes = [1, 128], strides = [1, 1]} : vector<4x128xf32> to vector<1x128xf32>
    %106 = vector.extract_strided_slice %99 {offsets = [2, 0], sizes = [1, 128], strides = [1, 1]} : vector<4x128xf32> to vector<1x128xf32>
    %107 = vector.extract_strided_slice %99 {offsets = [3, 0], sizes = [1, 128], strides = [1, 1]} : vector<4x128xf32> to vector<1x128xf32>
    %108 = arith.subf %102, %100 : vector<16x1xf32>
    %109 = arith.subf %103, %101 : vector<16x1xf32>
    %110 = arith.mulf %108, %109 : vector<16x1xf32>
    %111 = arith.subf %106, %104 : vector<1x128xf32>
    %112 = arith.subf %107, %105 : vector<1x128xf32>
    %113 = arith.mulf %111, %112 : vector<1x128xf32>
    %114 = vector.broadcast %102 : vector<16x1xf32> to vector<16x128xf32>
    %115 = vector.broadcast %106 : vector<1x128xf32> to vector<16x128xf32>
    %116 = arith.minimumf %114, %115 : vector<16x128xf32>
    %117 = vector.broadcast %100 : vector<16x1xf32> to vector<16x128xf32>
    %118 = vector.broadcast %104 : vector<1x128xf32> to vector<16x128xf32>
    %119 = arith.maximumf %117, %118 : vector<16x128xf32>
    %120 = arith.subf %116, %119 : vector<16x128xf32>
    %cst_18 = arith.constant 0.000000e+00 : f32
    %121 = vector.broadcast %cst_18 : f32 to vector<16x128xf32>
    %122 = arith.maximumf %120, %121 : vector<16x128xf32>
    %123 = vector.broadcast %103 : vector<16x1xf32> to vector<16x128xf32>
    %124 = vector.broadcast %107 : vector<1x128xf32> to vector<16x128xf32>
    %125 = arith.minimumf %123, %124 : vector<16x128xf32>
    %126 = vector.broadcast %101 : vector<16x1xf32> to vector<16x128xf32>
    %127 = vector.broadcast %105 : vector<1x128xf32> to vector<16x128xf32>
    %128 = arith.maximumf %126, %127 : vector<16x128xf32>
    %129 = arith.subf %125, %128 : vector<16x128xf32>
    %cst_19 = arith.constant 0.000000e+00 : f32
    %130 = vector.broadcast %cst_19 : f32 to vector<16x128xf32>
    %131 = arith.maximumf %129, %130 : vector<16x128xf32>
    %132 = arith.mulf %122, %131 : vector<16x128xf32>
    %133 = vector.broadcast %110 : vector<16x1xf32> to vector<16x128xf32>
    %134 = vector.broadcast %113 : vector<1x128xf32> to vector<16x128xf32>
    %135 = arith.addf %133, %134 : vector<16x128xf32>
    %136 = arith.subf %135, %132 : vector<16x128xf32>
    %cst_20 = arith.constant 1.000000e-07 : f32
    %137 = vector.broadcast %cst_20 : f32 to vector<16x128xf32>
    %138 = arith.maximumf %136, %137 : vector<16x128xf32>
    %139 = arith.divf %132, %138 : vector<16x128xf32>
    %c1_21 = arith.constant 1 : index
    %c0_22 = arith.constant 0 : index
    %c0_23 = arith.constant 0 : index
    %c0_24 = arith.constant 0 : index
    %140 = vector.load %arg3[%c1_21, %c0_22, %c0_23, %c0_24] : memref<2x2x16x128xf32, #tpu.memory_space<vmem>>, vector<1x1x16x128xf32>
    %141 = vector.shape_cast %140 : vector<1x1x16x128xf32> to vector<16x128xf32>
    %142 = vector.shape_cast %139 : vector<16x128xf32> to vector<1x1x16x128xf32>
    tpu.vector_store %arg3[%c1_21, %c0_22, %c0_23, %c0_24], %142 {strides = array<i32>} : memref<2x2x16x128xf32, #tpu.memory_space<vmem>>, vector<1x1x16x128xf32>,
    %143 = vector.extract_strided_slice %0 {offsets = [1, 1, 0, 0], sizes = [1, 1, 16, 4], strides = [1, 1, 1, 1]} : vector<2x2x16x4xf32> to vector<1x1x16x4xf32>
    %144 = vector.shape_cast %143 : vector<1x1x16x4xf32> to vector<16x4xf32>
    %145 = vector.extract_strided_slice %1 {offsets = [1, 0, 0], sizes = [1, 4, 128], strides = [1, 1, 1]} : vector<2x4x128xf32> to vector<1x4x128xf32>
    %146 = vector.shape_cast %145 : vector<1x4x128xf32> to vector<4x128xf32>
    %147 = vector.extract_strided_slice %144 {offsets = [0, 0], sizes = [16, 1], strides = [1, 1]} : vector<16x4xf32> to vector<16x1xf32>
    %148 = vector.extract_strided_slice %144 {offsets = [0, 1], sizes = [16, 1], strides = [1, 1]} : vector<16x4xf32> to vector<16x1xf32>
    %149 = vector.extract_strided_slice %144 {offsets = [0, 2], sizes = [16, 1], strides = [1, 1]} : vector<16x4xf32> to vector<16x1xf32>
    %150 = vector.extract_strided_slice %144 {offsets = [0, 3], sizes = [16, 1], strides = [1, 1]} : vector<16x4xf32> to vector<16x1xf32>
    %151 = vector.extract_strided_slice %146 {offsets = [0, 0], sizes = [1, 128], strides = [1, 1]} : vector<4x128xf32> to vector<1x128xf32>
    %152 = vector.extract_strided_slice %146 {offsets = [1, 0], sizes = [1, 128], strides = [1, 1]} : vector<4x128xf32> to vector<1x128xf32>
    %153 = vector.extract_strided_slice %146 {offsets = [2, 0], sizes = [1, 128], strides = [1, 1]} : vector<4x128xf32> to vector<1x128xf32>
    %154 = vector.extract_strided_slice %146 {offsets = [3, 0], sizes = [1, 128], strides = [1, 1]} : vector<4x128xf32> to vector<1x128xf32>
    %155 = arith.subf %149, %147 : vector<16x1xf32>
    %156 = arith.subf %150, %148 : vector<16x1xf32>
    %157 = arith.mulf %155, %156 : vector<16x1xf32>
    %158 = arith.subf %153, %151 : vector<1x128xf32>
    %159 = arith.subf %154, %152 : vector<1x128xf32>
    %160 = arith.mulf %158, %159 : vector<1x128xf32>
    %161 = vector.broadcast %149 : vector<16x1xf32> to vector<16x128xf32>
    %162 = vector.broadcast %153 : vector<1x128xf32> to vector<16x128xf32>
    %163 = arith.minimumf %161, %162 : vector<16x128xf32>
    %164 = vector.broadcast %147 : vector<16x1xf32> to vector<16x128xf32>
    %165 = vector.broadcast %151 : vector<1x128xf32> to vector<16x128xf32>
    %166 = arith.maximumf %164, %165 : vector<16x128xf32>
    %167 = arith.subf %163, %166 : vector<16x128xf32>
    %cst_25 = arith.constant 0.000000e+00 : f32
    %168 = vector.broadcast %cst_25 : f32 to vector<16x128xf32>
    %169 = arith.maximumf %167, %168 : vector<16x128xf32>
    %170 = vector.broadcast %150 : vector<16x1xf32> to vector<16x128xf32>
    %171 = vector.broadcast %154 : vector<1x128xf32> to vector<16x128xf32>
    %172 = arith.minimumf %170, %171 : vector<16x128xf32>
    %173 = vector.broadcast %148 : vector<16x1xf32> to vector<16x128xf32>
    %174 = vector.broadcast %152 : vector<1x128xf32> to vector<16x128xf32>
    %175 = arith.maximumf %173, %174 : vector<16x128xf32>
    %176 = arith.subf %172, %175 : vector<16x128xf32>
    %cst_26 = arith.constant 0.000000e+00 : f32
    %177 = vector.broadcast %cst_26 : f32 to vector<16x128xf32>
    %178 = arith.maximumf %176, %177 : vector<16x128xf32>
    %179 = arith.mulf %169, %178 : vector<16x128xf32>
    %180 = vector.broadcast %157 : vector<16x1xf32> to vector<16x128xf32>
    %181 = vector.broadcast %160 : vector<1x128xf32> to vector<16x128xf32>
    %182 = arith.addf %180, %181 : vector<16x128xf32>
    %183 = arith.subf %182, %179 : vector<16x128xf32>
    %cst_27 = arith.constant 1.000000e-07 : f32
    %184 = vector.broadcast %cst_27 : f32 to vector<16x128xf32>
    %185 = arith.maximumf %183, %184 : vector<16x128xf32>
    %186 = arith.divf %179, %185 : vector<16x128xf32>
    %c1_28 = arith.constant 1 : index
    %c1_29 = arith.constant 1 : index
    %c0_30 = arith.constant 0 : index
    %c0_31 = arith.constant 0 : index
    %187 = vector.load %arg3[%c1_28, %c1_29, %c0_30, %c0_31] : memref<2x2x16x128xf32, #tpu.memory_space<vmem>>, vector<1x1x16x128xf32>
    %188 = vector.shape_cast %187 : vector<1x1x16x128xf32> to vector<16x128xf32>
    %189 = vector.shape_cast %186 : vector<16x128xf32> to vector<1x1x16x128xf32>
    tpu.vector_store %arg3[%c1_28, %c1_29, %c0_30, %c0_31], %189 {strides = array<i32>} : memref<2x2x16x128xf32, #tpu.memory_space<vmem>>, vector<1x1x16x128xf32>,
    return
  }
  func.func @transform_0(%arg0: i32) -> (i32, i32, i32, i32) {
    %c0_i32 = arith.constant 0 : i32
    %c0_i32_0 = arith.constant 0 : i32
    %c0_i32_1 = arith.constant 0 : i32
    %c0_i32_2 = arith.constant 0 : i32
    %c0_i32_3 = arith.constant 0 : i32
    return %c0_i32, %c0_i32_0, %c0_i32_1, %c0_i32_2 : i32, i32, i32, i32
  }
  func.func @transform_1(%arg0: i32) -> (i32, i32, i32) {
    %c0_i32 = arith.constant 0 : i32
    %c0_i32_0 = arith.constant 0 : i32
    %c0_i32_1 = arith.constant 0 : i32
    %c0_i32_2 = arith.constant 0 : i32
    return %c0_i32, %c0_i32_0, %c0_i32_1 : i32, i32, i32
  }
  func.func @transform_2(%arg0: i32) -> (i32, i32, i32, i32) {
    %c0_i32 = arith.constant 0 : i32
    %c0_i32_0 = arith.constant 0 : i32
    %c0_i32_1 = arith.constant 0 : i32
    %c0_i32_2 = arith.constant 0 : i32
    %c0_i32_3 = arith.constant 0 : i32
    return %c0_i32, %c0_i32_0, %c0_i32_1, %c0_i32_2 : i32, i32, i32, i32
  }
}

</mosaic_0001>

<llo_original>
// kernel: tpu_custom_call.1
$region0: #{tpu_custom_call.1}
  #allocation0 [shape = 'u32[]', space=smem, size = 0x4, offset = 0x4, fixed_abs, tag = 'smem constant byte address 0x4 - core index']
  #allocation1 [shape = 'u32[72,128]{1,0:T(1,128)}', space=vmem, size = 0x9000, scoped, tag = 'internal scratch']
  %s0 = inlined_call_operand.vmem [shape: f32[2,2,16,4], index: 0, kind: input, shape index: {}]
  %s1 = inlined_call_operand.vmem [shape: f32[2,4,128], index: 1, kind: input, shape index: {}]
  %s2 = inlined_call_operand.hbm [shape: f32[2,2,16,128], index: 2, kind: output, shape index: {}]
  %s3 = sld [smem:[#allocation0]]
  $region18: #{tpu_custom_call.1} parent=0
    _
  %s5 = ssub.s32 1, %s3
  %s6 = scalar_select 0, %s5, %s3
  $region1: #{tpu_custom_call.1} parent=0
    #allocation2 [shape = 'u8[32768]{0}', space=vmem, size = 0x8000, scoped, tag = 'output window, operand 0, single buffered']
    #allocation3 [shape = 's32[1]{0}', space=sflag, size = 0x4, scoped, tag = 'scoped memory for tpu_custom_call.1']
    %7 = vsyncpa [#allocation3], 0
    // Predicated region
    $region2: #{tpu_custom_call.1} parent=1 // pred_check
      _
    $region3: #{tpu_custom_call.1} parent=1 // pred_check_branch
      %9 = sbr.rel (0) target = $region5
    $region4: #{tpu_custom_call.1} parent=1 // pred_region
      _
    $region5: #{tpu_custom_call.1} parent=1 // pred_fallthru
      _
    // Predicated region
    $region6: #{tpu_custom_call.1} parent=1 // pred_check
      _
    $region7: #{tpu_custom_call.1} parent=1 // pred_check_branch
      %11 = sbr.rel (0) target = $region9
    $region8: #{tpu_custom_call.1} parent=1 // pred_region
      _
    $region9: #{tpu_custom_call.1} parent=1 // pred_fallthru
      _
    %v12 = vld [vmem:[%s0] sm:$0xff]
    %v13 = vld [vmem:[%s0 + $0x8] sm:$0xff]
    %v14 = vld [vmem:[%s0 + $0x10] sm:$0xff]
    %v15 = vld [vmem:[%s0 + $0x18] sm:$0xff]
    %v16 = vld [vmem:[%s0 + $0x20] sm:$0xff]
    %v17 = vld [vmem:[%s0 + $0x28] sm:$0xff]
    %v18 = vld [vmem:[%s0 + $0x30] sm:$0xff]
    %v19 = vld [vmem:[%s0 + $0x38] sm:$0xff]
    %v20 = vld [vmem:[%s1] sm:$0xf]
    %v21 = vld [vmem:[%s1 + $0x4] sm:$0xf]
    %24 = vrot.lane.b32.xlu0 %v12, 2
    %v25 = vpop.permute.xlu0 %24
    %26 = vrot.lane.b32.xlu0 %v13, 2
    %v27 = vpop.permute.xlu0 %26
    %v30 = vsub.f32 %v12, %v25
    %v31 = vsub.f32 %v13, %v27
    %34 = vrot.lane.b32.xlu0 %v30, 127
    %v35 = vpop.permute.xlu0 %34
    %36 = vrot.lane.b32.xlu0 %v31, 127
    %v37 = vpop.permute.xlu0 %36
    %v40 = vmul.f32 %v30, %v35
    %v41 = vmul.f32 %v31, %v37
    %v43 = vrot.slane %v20, 6
    %v45 = vsub.f32 %v20, %v43
    %v47 = vrot.slane %v45, 1
    %v49 = vmul.f32 %v45, %v47
    %50 = vset.pattern.permute.xlu0 2
    %51 = vperm.xlu0 %50, %v12
    %v52 = vpop.permute.xlu0 %51
    %54 = vset.pattern.permute.xlu0 2
    %55 = vperm.xlu0 %54, %v13
    %v56 = vpop.permute.xlu0 %55
    %v58 = vperm.slane %v20, 2
    %v59 = vmin.f32 %v52, %v58
    %v60 = vmin.f32 %v56, %v58
    %61 = vset.pattern.permute.xlu0 0
    %62 = vperm.xlu0 %61, %v12
    %v63 = vpop.permute.xlu0 %62
    %65 = vset.pattern.permute.xlu0 0
    %66 = vperm.xlu0 %65, %v13
    %v67 = vpop.permute.xlu0 %66
    %v69 = vperm.slane %v20, 0
    %v70 = vmax.f32 %v63, %v69
    %v71 = vmax.f32 %v67, %v69
    %v72 = vsub.f32 %v59, %v70
    %v73 = vsub.f32 %v60, %v71
    %v74 = vmax.f32 %v72, 0.0
    %v75 = vmax.f32 %v73, 0.0
    %76 = vset.pattern.permute.xlu0 3
    %77 = vperm.xlu0 %76, %v12
    %v78 = vpop.permute.xlu0 %77
    %80 = vset.pattern.permute.xlu0 3
    %81 = vperm.xlu0 %80, %v13
    %v82 = vpop.permute.xlu0 %81
    %v84 = vperm.slane %v20, 3
    %v85 = vmin.f32 %v78, %v84
    %v86 = vmin.f32 %v82, %v84
    %87 = vset.pattern.permute.xlu0 1
    %88 = vperm.xlu0 %87, %v12
    %v89 = vpop.permute.xlu0 %88
    %91 = vset.pattern.permute.xlu0 1
    %92 = vperm.xlu0 %91, %v13
    %v93 = vpop.permute.xlu0 %92
    %v95 = vperm.slane %v20, 1
    %v96 = vmax.f32 %v89, %v95
    %v97 = vmax.f32 %v93, %v95
    %v98 = vsub.f32 %v85, %v96
    %v99 = vsub.f32 %v86, %v97
    %v100 = vmax.f32 %v98, 0.0
    %v101 = vmax.f32 %v99, 0.0
    %v102 = vmul.f32 %v74, %v100
    %v103 = vmul.f32 %v75, %v101
    %105 = vset.pattern.permute.xlu0 2
    %106 = vperm.xlu0 %105, %v40
    %v107 = vpop.permute.xlu0 %106
    %110 = vset.pattern.permute.xlu0 2
    %111 = vperm.xlu0 %110, %v41
    %v112 = vpop.permute.xlu0 %111
    %v114 = vperm.slane %v49, 2
    %v115 = vadd.f32 %v107, %v114
    %v116 = vadd.f32 %v112, %v114
    %v117 = vsub.f32 %v115, %v102
    %v118 = vsub.f32 %v116, %v103
    %v119 = vmax.f32 %v117, 1e-07
    %v120 = vmax.f32 %v118, 1e-07
    %v121 = vrcp.pop %v119
    %v122 = vmul.f32 %v119, %v121
    %v123 = vsub.f32 1.0, %v122
    %v124 = vmul.f32 %v121, %v123
    %v125 = vadd.f32 %v121, %v124
    %vm126 = vweird.f32 %v119
    %vm127 = vweird.f32 %v121
    %vm128 = vmor %vm126, %vm127
    %v129 = vsel %vm128, %v121, %v125
    %v130 = vand.u32 2147483647, %v119
    %vm131 = vcmp.eq.f32.partialorder %v130, 8.507059e+37
    %v132 = vand.u32 %v119, 2147483648
    %v133 = vor.u32 1.1754944e-38, %v132
    %v134 = vsel %vm131, %v133, %v129
    %v135 = vmul.f32 %v102, %v134
    %v136 = vrcp.pop %v120
    %v137 = vmul.f32 %v120, %v136
    %v138 = vsub.f32 1.0, %v137
    %v139 = vmul.f32 %v136, %v138
    %v140 = vadd.f32 %v136, %v139
    %vm141 = vweird.f32 %v120
    %vm142 = vweird.f32 %v136
    %vm143 = vmor %vm141, %vm142
    %v144 = vsel %vm143, %v136, %v140
    %v145 = vand.u32 2147483647, %v120
    %vm146 = vcmp.eq.f32.partialorder %v145, 8.507059e+37
    %v147 = vand.u32 %v120, 2147483648
    %v148 = vor.u32 1.1754944e-38, %v147
    %v149 = vsel %vm146, %v148, %v144
    %v150 = vmul.f32 %v103, %v149
    %151 = vst [vmem:[#allocation2] sm:$0xff] %v135
    %152 = vst [vmem:[#allocation2 + $0x8] sm:$0xff] %v150
    %155 = vrot.lane.b32.xlu0 %v14, 2
    %v156 = vpop.permute.xlu0 %155
    %157 = vrot.lane.b32.xlu0 %v15, 2
    %v158 = vpop.permute.xlu0 %157
    %v161 = vsub.f32 %v14, %v156
    %v162 = vsub.f32 %v15, %v158
    %165 = vrot.lane.b32.xlu0 %v161, 127
    %v166 = vpop.permute.xlu0 %165
    %167 = vrot.lane.b32.xlu0 %v162, 127
    %v168 = vpop.permute.xlu0 %167
    %v171 = vmul.f32 %v161, %v166
    %v172 = vmul.f32 %v162, %v168
    %v174 = vrot.slane %v21, 6
    %v176 = vsub.f32 %v21, %v174
    %v178 = vrot.slane %v176, 1
    %v180 = vmul.f32 %v176, %v178
    %181 = vset.pattern.permute.xlu0 2
    %182 = vperm.xlu0 %181, %v14
    %v183 = vpop.permute.xlu0 %182
    %185 = vset.pattern.permute.xlu0 2
    %186 = vperm.xlu0 %185, %v15
    %v187 = vpop.permute.xlu0 %186
    %v189 = vperm.slane %v21, 2
    %v190 = vmin.f32 %v183, %v189
    %v191 = vmin.f32 %v187, %v189
    %192 = vset.pattern.permute.xlu0 0
    %193 = vperm.xlu0 %192, %v14
    %v194 = vpop.permute.xlu0 %193
    %196 = vset.pattern.permute.xlu0 0
    %197 = vperm.xlu0 %196, %v15
    %v198 = vpop.permute.xlu0 %197
    %v200 = vperm.slane %v21, 0
    %v201 = vmax.f32 %v194, %v200
    %v202 = vmax.f32 %v198, %v200
    %v203 = vsub.f32 %v190, %v201
    %v204 = vsub.f32 %v191, %v202
    %v205 = vmax.f32 %v203, 0.0
    %v206 = vmax.f32 %v204, 0.0
    %207 = vset.pattern.permute.xlu0 3
    %208 = vperm.xlu0 %207, %v14
    %v209 = vpop.permute.xlu0 %208
    %211 = vset.pattern.permute.xlu0 3
    %212 = vperm.xlu0 %211, %v15
    %v213 = vpop.permute.xlu0 %212
    %v215 = vperm.slane %v21, 3
    %v216 = vmin.f32 %v209, %v215
    %v217 = vmin.f32 %v213, %v215
    %218 = vset.pattern.permute.xlu0 1
    %219 = vperm.xlu0 %218, %v14
    %v220 = vpop.permute.xlu0 %219
    %222 = vset.pattern.permute.xlu0 1
    %223 = vperm.xlu0 %222, %v15
    %v224 = vpop.permute.xlu0 %223
    %v226 = vperm.slane %v21, 1
    %v227 = vmax.f32 %v220, %v226
    %v228 = vmax.f32 %v224, %v226
    %v229 = vsub.f32 %v216, %v227
    %v230 = vsub.f32 %v217, %v228
    %v231 = vmax.f32 %v229, 0.0
    %v232 = vmax.f32 %v230, 0.0
    %v233 = vmul.f32 %v205, %v231
    %v234 = vmul.f32 %v206, %v232
    %236 = vset.pattern.permute.xlu0 2
    %237 = vperm.xlu0 %236, %v171
    %v238 = vpop.permute.xlu0 %237
    %241 = vset.pattern.permute.xlu0 2
    %242 = vperm.xlu0 %241, %v172
    %v243 = vpop.permute.xlu0 %242
    %v245 = vperm.slane %v180, 2
    %v246 = vadd.f32 %v238, %v245
    %v247 = vadd.f32 %v243, %v245
    %v248 = vsub.f32 %v246, %v233
    %v249 = vsub.f32 %v247, %v234
    %v250 = vmax.f32 %v248, 1e-07
    %v251 = vmax.f32 %v249, 1e-07
    %v252 = vrcp.pop %v250
    %v253 = vmul.f32 %v250, %v252
    %v254 = vsub.f32 1.0, %v253
    %v255 = vmul.f32 %v252, %v254
    %v256 = vadd.f32 %v252, %v255
    %vm257 = vweird.f32 %v250
    %vm258 = vweird.f32 %v252
    %vm259 = vmor %vm257, %vm258
    %v260 = vsel %vm259, %v252, %v256
    %v261 = vand.u32 2147483647, %v250
    %vm262 = vcmp.eq.f32.partialorder %v261, 8.507059e+37
    %v263 = vand.u32 %v250, 2147483648
    %v264 = vor.u32 1.1754944e-38, %v263
    %v265 = vsel %vm262, %v264, %v260
    %v266 = vmul.f32 %v233, %v265
    %v267 = vrcp.pop %v251
    %v268 = vmul.f32 %v251, %v267
    %v269 = vsub.f32 1.0, %v268
    %v270 = vmul.f32 %v267, %v269
    %v271 = vadd.f32 %v267, %v270
    %vm272 = vweird.f32 %v251
    %vm273 = vweird.f32 %v267
    %vm274 = vmor %vm272, %vm273
    %v275 = vsel %vm274, %v267, %v271
    %v276 = vand.u32 2147483647, %v251
    %vm277 = vcmp.eq.f32.partialorder %v276, 8.507059e+37
    %v278 = vand.u32 %v251, 2147483648
    %v279 = vor.u32 1.1754944e-38, %v278
    %v280 = vsel %vm277, %v279, %v275
    %v281 = vmul.f32 %v234, %v280
    %s282 = scalar_lea.vmem [#allocation2], 16
    %283 = vst [vmem:[%s282] sm:$0xff] %v266
    %284 = vst [vmem:[%s282 + $0x8] sm:$0xff] %v281
    %287 = vrot.lane.b32.xlu0 %v16, 2
    %v288 = vpop.permute.xlu0 %287
    %289 = vrot.lane.b32.xlu0 %v17, 2
    %v290 = vpop.permute.xlu0 %289
    %v293 = vsub.f32 %v16, %v288
    %v294 = vsub.f32 %v17, %v290
    %297 = vrot.lane.b32.xlu0 %v293, 127
    %v298 = vpop.permute.xlu0 %297
    %299 = vrot.lane.b32.xlu0 %v294, 127
    %v300 = vpop.permute.xlu0 %299
    %v303 = vmul.f32 %v293, %v298
    %v304 = vmul.f32 %v294, %v300
    %305 = vset.pattern.permute.xlu0 2
    %306 = vperm.xlu0 %305, %v16
    %v307 = vpop.permute.xlu0 %306
    %309 = vset.pattern.permute.xlu0 2
    %310 = vperm.xlu0 %309, %v17
    %v311 = vpop.permute.xlu0 %310
    %v313 = vmin.f32 %v307, %v58
    %v314 = vmin.f32 %v311, %v58
    %315 = vset.pattern.permute.xlu0 0
    %316 = vperm.xlu0 %315, %v16
    %v317 = vpop.permute.xlu0 %316
    %319 = vset.pattern.permute.xlu0 0
    %320 = vperm.xlu0 %319, %v17
    %v321 = vpop.permute.xlu0 %320
    %v323 = vmax.f32 %v317, %v69
    %v324 = vmax.f32 %v321, %v69
    %v325 = vsub.f32 %v313, %v323
    %v326 = vsub.f32 %v314, %v324
    %v327 = vmax.f32 %v325, 0.0
    %v328 = vmax.f32 %v326, 0.0
    %329 = vset.pattern.permute.xlu0 3
    %330 = vperm.xlu0 %329, %v16
    %v331 = vpop.permute.xlu0 %330
    %333 = vset.pattern.permute.xlu0 3
    %334 = vperm.xlu0 %333, %v17
    %v335 = vpop.permute.xlu0 %334
    %v337 = vmin.f32 %v331, %v84
    %v338 = vmin.f32 %v335, %v84
    %339 = vset.pattern.permute.xlu0 1
    %340 = vperm.xlu0 %339, %v16
    %v341 = vpop.permute.xlu0 %340
    %343 = vset.pattern.permute.xlu0 1
    %344 = vperm.xlu0 %343, %v17
    %v345 = vpop.permute.xlu0 %344
    %v347 = vmax.f32 %v341, %v95
    %v348 = vmax.f32 %v345, %v95
    %v349 = vsub.f32 %v337, %v347
    %v350 = vsub.f32 %v338, %v348
    %v351 = vmax.f32 %v349, 0.0
    %v352 = vmax.f32 %v350, 0.0
    %v353 = vmul.f32 %v327, %v351
    %v354 = vmul.f32 %v328, %v352
    %356 = vset.pattern.permute.xlu0 2
    %357 = vperm.xlu0 %356, %v303
    %v358 = vpop.permute.xlu0 %357
    %361 = vset.pattern.permute.xlu0 2
    %362 = vperm.xlu0 %361, %v304
    %v363 = vpop.permute.xlu0 %362
    %v365 = vadd.f32 %v358, %v114
    %v366 = vadd.f32 %v363, %v114
    %v367 = vsub.f32 %v365, %v353
    %v368 = vsub.f32 %v366, %v354
    %v369 = vmax.f32 %v367, 1e-07
    %v370 = vmax.f32 %v368, 1e-07
    %v371 = vrcp.pop %v369
    %v372 = vmul.f32 %v369, %v371
    %v373 = vsub.f32 1.0, %v372
    %v374 = vmul.f32 %v371, %v373
    %v375 = vadd.f32 %v371, %v374
    %vm376 = vweird.f32 %v369
    %vm377 = vweird.f32 %v371
    %vm378 = vmor %vm376, %vm377
    %v379 = vsel %vm378, %v371, %v375
    %v380 = vand.u32 2147483647, %v369
    %vm381 = vcmp.eq.f32.partialorder %v380, 8.507059e+37
    %v382 = vand.u32 %v369, 2147483648
    %v383 = vor.u32 1.1754944e-38, %v382
    %v384 = vsel %vm381, %v383, %v379
    %v385 = vmul.f32 %v353, %v384
    %v386 = vrcp.pop %v370
    %v387 = vmul.f32 %v370, %v386
    %v388 = vsub.f32 1.0, %v387
    %v389 = vmul.f32 %v386, %v388
    %v390 = vadd.f32 %v386, %v389
    %vm391 = vweird.f32 %v370
    %vm392 = vweird.f32 %v386
    %vm393 = vmor %vm391, %vm392
    %v394 = vsel %vm393, %v386, %v390
    %v395 = vand.u32 2147483647, %v370
    %vm396 = vcmp.eq.f32.partialorder %v395, 8.507059e+37
    %v397 = vand.u32 %v370, 2147483648
    %v398 = vor.u32 1.1754944e-38, %v397
    %v399 = vsel %vm396, %v398, %v394
    %v400 = vmul.f32 %v354, %v399
    %s401 = scalar_lea.vmem [#allocation2], 32
    %402 = vst [vmem:[%s401] sm:$0xff] %v385
    %403 = vst [vmem:[%s401 + $0x8] sm:$0xff] %v400
    %406 = vrot.lane.b32.xlu0 %v18, 2
    %v407 = vpop.permute.xlu0 %406
    %408 = vrot.lane.b32.xlu0 %v19, 2
    %v409 = vpop.permute.xlu0 %408
    %v412 = vsub.f32 %v18, %v407
    %v413 = vsub.f32 %v19, %v409
    %416 = vrot.lane.b32.xlu0 %v412, 127
    %v417 = vpop.permute.xlu0 %416
    %418 = vrot.lane.b32.xlu0 %v413, 127
    %v419 = vpop.permute.xlu0 %418
    %v422 = vmul.f32 %v412, %v417
    %v423 = vmul.f32 %v413, %v419
    %424 = vset.pattern.permute.xlu0 2
    %425 = vperm.xlu0 %424, %v18
    %v426 = vpop.permute.xlu0 %425
    %428 = vset.pattern.permute.xlu0 2
    %429 = vperm.xlu0 %428, %v19
    %v430 = vpop.permute.xlu0 %429
    %v432 = vmin.f32 %v426, %v189
    %v433 = vmin.f32 %v430, %v189
    %434 = vset.pattern.permute.xlu0 0
    %435 = vperm.xlu0 %434, %v18
    %v436 = vpop.permute.xlu0 %435
    %438 = vset.pattern.permute.xlu0 0
    %439 = vperm.xlu0 %438, %v19
    %v440 = vpop.permute.xlu0 %439
    %v442 = vmax.f32 %v436, %v200
    %v443 = vmax.f32 %v440, %v200
    %v444 = vsub.f32 %v432, %v442
    %v445 = vsub.f32 %v433, %v443
    %v446 = vmax.f32 %v444, 0.0
    %v447 = vmax.f32 %v445, 0.0
    %448 = vset.pattern.permute.xlu0 3
    %449 = vperm.xlu0 %448, %v18
    %v450 = vpop.permute.xlu0 %449
    %452 = vset.pattern.permute.xlu0 3
    %453 = vperm.xlu0 %452, %v19
    %v454 = vpop.permute.xlu0 %453
    %v456 = vmin.f32 %v450, %v215
    %v457 = vmin.f32 %v454, %v215
    %458 = vset.pattern.permute.xlu0 1
    %459 = vperm.xlu0 %458, %v18
    %v460 = vpop.permute.xlu0 %459
    %462 = vset.pattern.permute.xlu0 1
    %463 = vperm.xlu0 %462, %v19
    %v464 = vpop.permute.xlu0 %463
    %v466 = vmax.f32 %v460, %v226
    %v467 = vmax.f32 %v464, %v226
    %v468 = vsub.f32 %v456, %v466
    %v469 = vsub.f32 %v457, %v467
    %v470 = vmax.f32 %v468, 0.0
    %v471 = vmax.f32 %v469, 0.0
    %v472 = vmul.f32 %v446, %v470
    %v473 = vmul.f32 %v447, %v471
    %475 = vset.pattern.permute.xlu0 2
    %476 = vperm.xlu0 %475, %v422
    %v477 = vpop.permute.xlu0 %476
    %480 = vset.pattern.permute.xlu0 2
    %481 = vperm.xlu0 %480, %v423
    %v482 = vpop.permute.xlu0 %481
    %v484 = vadd.f32 %v477, %v245
    %v485 = vadd.f32 %v482, %v245
    %v486 = vsub.f32 %v484, %v472
    %v487 = vsub.f32 %v485, %v473
    %v488 = vmax.f32 %v486, 1e-07
    %v489 = vmax.f32 %v487, 1e-07
    %v490 = vrcp.pop %v488
    %v491 = vmul.f32 %v488, %v490
    %v492 = vsub.f32 1.0, %v491
    %v493 = vmul.f32 %v490, %v492
    %v494 = vadd.f32 %v490, %v493
    %vm495 = vweird.f32 %v488
    %vm496 = vweird.f32 %v490
    %vm497 = vmor %vm495, %vm496
    %v498 = vsel %vm497, %v490, %v494
    %v499 = vand.u32 2147483647, %v488
    %vm500 = vcmp.eq.f32.partialorder %v499, 8.507059e+37
    %v501 = vand.u32 %v488, 2147483648
    %v502 = vor.u32 1.1754944e-38, %v501
    %v503 = vsel %vm500, %v502, %v498
    %v504 = vmul.f32 %v472, %v503
    %v505 = vrcp.pop %v489
    %v506 = vmul.f32 %v489, %v505
    %v507 = vsub.f32 1.0, %v506
    %v508 = vmul.f32 %v505, %v507
    %v509 = vadd.f32 %v505, %v508
    %vm510 = vweird.f32 %v489
    %vm511 = vweird.f32 %v505
    %vm512 = vmor %vm510, %vm511
    %v513 = vsel %vm512, %v505, %v509
    %v514 = vand.u32 2147483647, %v489
    %vm515 = vcmp.eq.f32.partialorder %v514, 8.507059e+37
    %v516 = vand.u32 %v489, 2147483648
    %v517 = vor.u32 1.1754944e-38, %v516
    %v518 = vsel %vm515, %v517, %v513
    %v519 = vmul.f32 %v473, %v518
    %s520 = scalar_lea.vmem [#allocation2], 48
    %521 = vst [vmem:[%s520] sm:$0xff] %v504
    %522 = vst [vmem:[%s520 + $0x8] sm:$0xff] %v519
    // Predicated region
    $region10: #{tpu_custom_call.1} parent=1 // pred_check
      _
    $region11: #{tpu_custom_call.1} parent=1 // pred_check_branch
      %524 = sbr.rel (0) target = $region13
    $region12: #{tpu_custom_call.1} parent=1 // pred_region
      %526 = vsyncadd [#allocation3], 0
      %s527 = sshll.u32 [#allocation2], 4
      %s528 = int_to_ptr.vmem [resolvable:$true] %s527
      %s529 = sshll.u32 %s2, 4
      %s530 = int_to_ptr.hbm [resolvable:$true] %s529
      %535 = dma.vmem_to_hbm [thread:$0]  %s528, 1024, %s530, [#allocation3], 128, 128, 8
    $region13: #{tpu_custom_call.1} parent=1 // pred_fallthru
      _
    // Predicated region
    $region14: #{tpu_custom_call.1} parent=1 // pred_check
      _
    $region15: #{tpu_custom_call.1} parent=1 // pred_check_branch
      %537 = sbr.rel (0) target = $region17
    $region16: #{tpu_custom_call.1} parent=1 // pred_region
      %539 = dma.done [#allocation3], 1024
    $region17: #{tpu_custom_call.1} parent=1 // pred_fallthru
      _
    %540 = vsyncpa [#allocation3], 1

</llo_original>
